<compile_context>
chip_gen: v7x
topology: tpu7x:2x2x1
jax: 0.10.0
libtpu: 0.0.40
codegen_flags: <defaults>
</compile_context>

<pallas_src>
import functools

import jax
import jax.numpy as jnp
from jax.experimental import pallas as pl
from jax.experimental.pallas import tpu as pltpu


_LANES = 128


def _round_up(n: int, m: int) -> int:
    return -(-n // m) * m


def _device_block_config():
    """(target block bytes, scoped-VMEM limit bytes) per TPU generation."""
    try:
        kind = jax.devices()[0].device_kind.lower()
    except Exception:  # pragma: no cover - defensive
        kind = ""
    if "v7" in kind:
        # 64 MiB VMEM/TC, ~3.2 TB/s HBM: big blocks, but budget against 64 MiB.
        return 8 << 20, 48 << 20
    if "v6" in kind:
        # 128 MiB VMEM, ~1.4 TB/s HBM.
        return 8 << 20, 64 << 20
    # v5e (16 MiB scoped default) / v5p / v4 / unknown: stay modest but raise limit.
    return 4 << 20, 32 << 20


def _ternarize_kernel(x_ref, o_ref, *, factor):
    # x_ref/o_ref: (tile_rows, 128) VMEM tiles in the caller's dtype.
    # clip+round collapses to two strict compares (strictness reproduces
    # round-half-to-even at the +/-0.5 ties: both give 0 there).
    fx = factor * x_ref[...].astype(jnp.float32)
    pos = (fx > 0.5).astype(o_ref.dtype)
    neg = (fx < -0.5).astype(o_ref.dtype)
    o_ref[...] = pos - neg


@functools.partial(jax.jit, static_argnames=("zero_window_width", "donate_input"))
def ternarize(x: jax.Array, zero_window_width: float = 0.5,
              donate_input: bool = False) -> jax.Array:
    """Ternarize to {-1, 0, 1}. Elementwise; any shape / float dtype."""
    orig_shape = x.shape
    dtype = x.dtype
    factor = float(0.5 / zero_window_width)  # trace-time constant
    total = x.size
    if total == 0:
        return x

    itemsize = jnp.dtype(dtype).itemsize
    # Sublane granularity depends on dtype packing (f32: 8, bf16: 16, 8-bit: 32).
    sub = max(8, 32 // itemsize)

    block_bytes, vmem_limit = _device_block_config()
    tile_rows_max = max(sub, (block_bytes // (_LANES * itemsize)) // sub * sub)

    x_flat = x.reshape(-1)
    pad = (-total) % _LANES
    if pad:
        # Misaligned fallback: pad only to the next 128-lane boundary (one extra
        # input copy + one output slice).  Aligned inputs skip this entirely.
        x_flat = jnp.pad(x_flat, (0, pad))
    rows = (total + pad) // _LANES
    x2d = x_flat.reshape(rows, _LANES)

    # Keep at least 2 grid steps so v7x can split work across both TensorCores;
    # for large inputs this is a no-op, for small ones the extra ~0.35us step is
    # negligible on single-TC chips.
    tile_rows = min(tile_rows_max, _round_up(-(-rows // 2), sub))
    tile_rows = max(tile_rows, sub)
    grid = (pl.cdiv(rows, tile_rows),)  # ragged last block handled by Pallas

    # Alias output onto the input buffer when it is safe-by-construction (the
    # padded intermediate is dead after the call) or when the caller donates.
    alias = {0: 0} if (pad or donate_input) else {}

    out2d = pl.pallas_call(
        functools.partial(_ternarize_kernel, factor=factor),
        out_shape=jax.ShapeDtypeStruct((rows, _LANES), dtype),
        grid=grid,
        in_specs=[pl.BlockSpec((tile_rows, _LANES), lambda i: (i, 0))],
        out_specs=pl.BlockSpec((tile_rows, _LANES), lambda i: (i, 0)),
        compiler_params=pltpu.CompilerParams(
            dimension_semantics=("parallel",),
            vmem_limit_bytes=vmem_limit,
        ),
        cost_estimate=pl.CostEstimate(
            flops=4 * total,
            transcendentals=0,
            bytes_accessed=2 * total * itemsize,
        ),
        input_output_aliases=alias,
    )(x2d)

    out = out2d.reshape(-1)
    if pad:
        out = out[:total]
    return out.reshape(orig_shape)


if __name__ == "__main__":
    key = jax.random.PRNGKey(0)

    # Small NCHW input consistent with conv-style usage (2048 elems -> aligned path).
    x = jax.random.normal(key, (2, 4, 16, 16), dtype=jnp.float32) * 2.0
    y = jax.block_until_ready(ternarize(x, zero_window_width=0.5))

    factor = 0.5 / 0.5
    ref = jnp.round(jnp.clip(factor * x, -1.0, 1.0))
    assert y.shape == x.shape and y.dtype == x.dtype
    assert bool(jnp.all(y == ref))
    assert bool(jnp.all((y == -1.0) | (y == 0.0) | (y == 1.0)))

    # Ragged case (total % 128 != 0): exercises the pad fallback + partial block.
    x2 = jax.random.normal(jax.random.PRNGKey(1), (3, 5, 17, 19), dtype=jnp.float32)
    y2 = jax.block_until_ready(ternarize(x2, zero_window_width=0.25))
    ref2 = jnp.round(jnp.clip((0.5 / 0.25) * x2, -1.0, 1.0))
    assert bool(jnp.all(y2 == ref2))

    # bf16 path (different sublane packing) + output-aliasing code path.
    x3 = (jax.random.normal(jax.random.PRNGKey(2), (2, 4, 16, 16)) * 2.0).astype(jnp.bfloat16)
    y3 = jax.block_until_ready(ternarize(x3, zero_window_width=0.5, donate_input=True))
    ref3 = jnp.round(jnp.clip(x3.astype(jnp.float32), -1.0, 1.0)).astype(jnp.bfloat16)
    assert y3.dtype == jnp.bfloat16
    assert bool(jnp.all(y3 == ref3))

    print("KERNEL_OK")
</pallas_src>

<mosaic_0001>
module attributes {stable_mosaic.version = 11 : i64} {
  func.func @_ternarize_kernel(%arg0: i32, %arg1: memref<8x128xf32, #tpu.memory_space<vmem>>, %arg2: memref<8x128xf32, #tpu.memory_space<vmem>>) attributes {dimension_semantics = [#tpu.dimension_semantics<parallel>], iteration_bounds = array<i64: 2>, scalar_prefetch = 0 : i64, scratch_operands = 0 : i64, tpu.core_type = #tpu.core_type<tc>, window_params = [{transform_indices = @transform_0, window_bounds = array<i64: 8, 128>}, {transform_indices = @transform_1, window_bounds = array<i64: 8, 128>}]} {
    %c0 = arith.constant 0 : index
    %c0_0 = arith.constant 0 : index
    %0 = vector.load %arg1[%c0, %c0_0] : memref<8x128xf32, #tpu.memory_space<vmem>>, vector<8x128xf32>
    %cst = arith.constant 1.000000e+00 : f32
    %1 = vector.broadcast %cst : f32 to vector<8x128xf32>
    %2 = arith.mulf %1, %0 : vector<8x128xf32>
    %cst_1 = arith.constant 5.000000e-01 : f32
    %3 = vector.broadcast %cst_1 : f32 to vector<8x128xf32>
    %4 = arith.cmpf ogt, %2, %3 : vector<8x128xf32>
    %5 = arith.extui %4 : vector<8x128xi1> to vector<8x128xi32>
    %6 = arith.sitofp %5 : vector<8x128xi32> to vector<8x128xf32>
    %cst_2 = arith.constant -5.000000e-01 : f32
    %7 = vector.broadcast %cst_2 : f32 to vector<8x128xf32>
    %8 = arith.cmpf olt, %2, %7 : vector<8x128xf32>
    %9 = arith.extui %8 : vector<8x128xi1> to vector<8x128xi32>
    %10 = arith.sitofp %9 : vector<8x128xi32> to vector<8x128xf32>
    %11 = arith.subf %6, %10 : vector<8x128xf32>
    %c0_3 = arith.constant 0 : index
    %c0_4 = arith.constant 0 : index
    %12 = vector.load %arg2[%c0_3, %c0_4] : memref<8x128xf32, #tpu.memory_space<vmem>>, vector<8x128xf32>
    tpu.vector_store %arg2[%c0_3, %c0_4], %11 {strides = array<i32>} : memref<8x128xf32, #tpu.memory_space<vmem>>, vector<8x128xf32>,
    return
  }
  func.func @transform_0(%arg0: i32) -> (i32, i32) {
    %c0_i32 = arith.constant 0 : i32
    %c0_i32_0 = arith.constant 0 : i32
    return %arg0, %c0_i32 : i32, i32
  }
  func.func @transform_1(%arg0: i32) -> (i32, i32) {
    %c0_i32 = arith.constant 0 : i32
    %c0_i32_0 = arith.constant 0 : i32
    return %arg0, %c0_i32 : i32, i32
  }
}

</mosaic_0001>

<llo_original>
// kernel: ternarize.1
$region0: #{ternarize.1}
  #allocation0 [shape = 'u32[]', space=smem, size = 0x4, offset = 0x4, fixed_abs, tag = 'smem constant byte address 0x4 - core index']
  #allocation1 [shape = 'u32[144,128]{1,0:T(1,128)}', space=vmem, size = 0x12000, scoped, tag = 'internal scratch']
  %s0 = inlined_call_operand.vmem [shape: f32[16,128], index: 0, kind: input, shape index: {}]
  %s1 = inlined_call_operand.vmem [shape: f32[16,128], index: 1, kind: output, shape index: {}]
  %s2 = sld [smem:[#allocation0]]
  $region37: #{ternarize.1} parent=0
    _
  %s4 = ssub.s32 1, %s2
  %s5 = scalar_select 0, %s4, %s2
  loop: start=0, step=1, limit=4
  $region2: #{ternarize.1} parent=0 // loop_pre_header
    _
  $region3: #{ternarize.1} parent=0 // loop_header
    %s7 = sphi 0, %s11
    %p8 = scmp.ge.s32.totalorder %s7, 4
    %s17 = sphi 0, %s19
    %s20 = sphi 0, %s17
    %s21 = sphi 0, %s20
    %s37 = sphi 0, %s21
    %s43 = sphi 0, %s45
    %s46 = sphi 0, %s43
    %s47 = sphi 0, %s46
    %s63 = sphi 0, %s47
  $region4: #{ternarize.1} parent=0 // loop_header_branch
    %10 = sbr.rel (%p8) target = $region8
  $region5: #{ternarize.1} parent=0 // loop_body
    %s12 = ssub.s32 %s7, 1
    %s13 = ssub.s32 %s7, 2
    %s14 = sadd.s32 %s7, 1
    %s15 = ssub.s32 %s7, %s14
    %p16 = scmp.eq.s32.totalorder %s15, 0
    %s18 = sadd.s32 %s17, 1
    %s19 = scalar_select %p16, %s17, %s18
    %p22 = pneg %p16
    %p23 = scmp.eq.s32.totalorder %s7, 1
    %p24 = por %p22, %p23
    %p25 = scmp.ne.s32.totalorder %s17, %s20
    %p26 = scmp.eq.s32.totalorder %s7, 0
    %p27 = por %p25, %p26
    %p28 = scmp.ne.s32.totalorder %s17, %s20
    %p29 = scmp.eq.s32.totalorder %s12, 1
    %p30 = por %p28, %p29
    %p31 = scmp.ne.s32.totalorder %s20, %s21
    %p32 = scmp.eq.s32.totalorder %s12, 0
    %p33 = por %p31, %p32
    %p34 = scmp.ne.s32.totalorder %s20, %s21
    %p35 = scmp.eq.s32.totalorder %s13, 1
    %p36 = por %p34, %p35
    %p38 = scmp.ne.s32.totalorder %s21, %s37
    %p39 = scmp.eq.s32.totalorder %s13, 0
    %p40 = por %p38, %p39
    %s41 = ssub.s32 %s7, %s14
    %p42 = scmp.eq.s32.totalorder %s41, 0
    %s44 = sadd.s32 %s43, 1
    %s45 = scalar_select %p42, %s43, %s44
    %p48 = pneg %p42
    %p49 = scmp.eq.s32.totalorder %s7, 1
    %p50 = por %p48, %p49
    %p51 = scmp.ne.s32.totalorder %s43, %s46
    %p52 = scmp.eq.s32.totalorder %s7, 0
    %p53 = por %p51, %p52
    %p54 = scmp.ne.s32.totalorder %s43, %s46
    %p55 = scmp.eq.s32.totalorder %s12, 1
    %p56 = por %p54, %p55
    %p57 = scmp.ne.s32.totalorder %s46, %s47
    %p58 = scmp.eq.s32.totalorder %s12, 0
    %p59 = por %p57, %p58
    %p60 = scmp.ne.s32.totalorder %s46, %s47
    %p61 = scmp.eq.s32.totalorder %s13, 1
    %p62 = por %p60, %p61
    %p64 = scmp.ne.s32.totalorder %s47, %s63
    %p65 = scmp.eq.s32.totalorder %s13, 0
    %p66 = por %p64, %p65
    %p67 = scmp.le.s32.totalorder 1, %s7
    %p68 = scmp.lt.s32.totalorder %s7, 3
    %p69 = pnand %p67, %p68
    %p70 = pneg %p69
    // Predicated region
    $region9: #{ternarize.1} parent=5 // pred_check
      _
    $region10: #{ternarize.1} parent=5 // pred_check_branch
      %72 = sbr.rel (%p69) target = $region12
    $region11: #{ternarize.1} parent=5 // pred_region
      %s73 = ssub.s32 %s7, 1
    $region12: #{ternarize.1} parent=5 // pred_fallthru
      _
    %p74 = scmp.lt.s32.totalorder %s7, 2
    // Predicated region
    $region13: #{ternarize.1} parent=5 // pred_check
      %p75 = pneg %p74
    $region14: #{ternarize.1} parent=5 // pred_check_branch
      %77 = sbr.rel (%p75) target = $region16
    $region15: #{ternarize.1} parent=5 // pred_region
      // Predicated region
      $region17: #{ternarize.1} parent=15 // pred_check
        %p78 = pneg %p27
      $region18: #{ternarize.1} parent=15 // pred_check_branch
        %80 = sbr.rel (%p78) target = $region20
      $region19: #{ternarize.1} parent=15 // pred_region
        %p81 = scmp.lt.s32.totalorder %s7, 1
        %s82 = scalar_select %p81, %s7, 1
        %s83 = smul.addr %s82, 8
        %s84 = scalar_lea.vmem %s0, %s83
      $region20: #{ternarize.1} parent=15 // pred_fallthru
        _
    $region16: #{ternarize.1} parent=5 // pred_fallthru
      _
    %p85 = scmp.le.s32.totalorder 1, %s7
    %p86 = scmp.lt.s32.totalorder %s7, 3
    %p87 = pnand %p85, %p86
    %p88 = pneg %p87
    // Predicated region
    $region21: #{ternarize.1} parent=5 // pred_check
      _
    $region22: #{ternarize.1} parent=5 // pred_check_branch
      %90 = sbr.rel (%p87) target = $region24
    $region23: #{ternarize.1} parent=5 // pred_region
      %s91 = ssub.s32 %s7, 1
      %p92 = scmp.lt.s32.totalorder %s12, 1
      %s93 = scalar_select %p92, %s12, 1
      %s94 = smul.addr %s93, 8
      %s95 = scalar_lea.vmem %s0, %s94
      %p96 = pneg %p33
      %p97 = pneg %p30
      %p98 = pneg %p59
      %p99 = pneg %p56
      %p100 = scmp.lt.s32.totalorder %s12, 1
      %s101 = scalar_select %p100, %s12, 1
      %s102 = smul.addr %s101, 8
      %s103 = scalar_lea.vmem %s1, %s102
      %p104 = scmp.lt.s32.totalorder %s12, 1
      %s105 = scalar_select %p104, %s12, 1
      %s106 = smul.addr %s105, 8
      %s107 = scalar_lea.vmem %s0, %s106
      %p108 = scmp.lt.s32.totalorder %s12, 1
      %s109 = scalar_select %p108, %s12, 1
      %s110 = smul.addr %s109, 8
      %s111 = scalar_lea.vmem %s1, %s110
      %v112 = vld [vmem:[%s107] sm:$0xff]
      %vm113 = vcmp.gt.f32.partialorder %v112, 0.5
      %v114 = vsel %vm113, 1, 0
      %v115 = vcvt.s32.f32 %v114
      %vm116 = vcmp.lt.f32.partialorder %v112, -0.5
      %v117 = vsel %vm116, 1, 0
      %v118 = vcvt.s32.f32 %v117
      %v119 = vsub.f32 %v115, %v118
      %120 = vst [vmem:[%s111] sm:$0xff] %v119
      %p121 = scmp.lt.s32.totalorder %s12, 1
      %s122 = scalar_select %p121, %s12, 1
      %s123 = smul.addr %s122, 8
      %s124 = scalar_lea.vmem %s1, %s123
      // Predicated region
      $region25: #{ternarize.1} parent=23 // pred_check
        %p125 = pneg %p56
      $region26: #{ternarize.1} parent=23 // pred_check_branch
        %127 = sbr.rel (%p125) target = $region28
      $region27: #{ternarize.1} parent=23 // pred_region
        _
      $region28: #{ternarize.1} parent=23 // pred_fallthru
        _
    $region24: #{ternarize.1} parent=5 // pred_fallthru
      _
    %p128 = scmp.le.s32.totalorder 2, %s7
    // Predicated region
    $region29: #{ternarize.1} parent=5 // pred_check
      %p129 = pneg %p128
    $region30: #{ternarize.1} parent=5 // pred_check_branch
      %131 = sbr.rel (%p129) target = $region32
    $region31: #{ternarize.1} parent=5 // pred_region
      %s132 = ssub.s32 %s7, 2
      // Predicated region
      $region33: #{ternarize.1} parent=31 // pred_check
        %p133 = pneg %p62
      $region34: #{ternarize.1} parent=31 // pred_check_branch
        %135 = sbr.rel (%p133) target = $region36
      $region35: #{ternarize.1} parent=31 // pred_region
        %p136 = scmp.lt.s32.totalorder %s13, 1
        %s137 = scalar_select %p136, %s13, 1
        %s138 = smul.addr %s137, 8
        %s139 = scalar_lea.vmem %s1, %s138
      $region36: #{ternarize.1} parent=31 // pred_fallthru
        _
    $region32: #{ternarize.1} parent=5 // pred_fallthru
      _
  $region6: #{ternarize.1} parent=0 // loop_footer
    %s11 = sadd.s32 1, %s7
  $region7: #{ternarize.1} parent=0 // loop_footer_branch
    %6 = sbr.rel target = $region3
  $region8: #{ternarize.1} parent=0 // loop_exit
    _

</llo_original>
